<compile_context>
chip_gen: v7x
topology: tpu7x:2x2x1
jax: 0.10.0
libtpu: 0.0.40
codegen_flags: <defaults>
</compile_context>

<pallas_src>
import functools
import math

import jax
import jax.numpy as jnp
import numpy as np
from jax.experimental import pallas as pl
from jax.experimental.pallas import tpu as pltpu

NHID = 32            # config['nhid']
HID = NHID // 2      # hidden per direction (16)
ENT_LEN = [3, 2]     # entities per example (static graph-batch bookkeeping, as in GraphWriter)
ROW_BLOCK = 8        # entity rows per grid step (sublane multiple)


# ----------------------------- Pallas kernel ------------------------------
def _bilstm_kernel(x_ref, lens_ref, wih_ref, whh_ref, b_ref, out_ref, xg_ref, *, seq_len, hid):
    """Fused bidirectional LSTM over packed sequences (one RB-row block).

    x_ref   : (T, RB, 2*NIN) f32   row r at step t carries [x[t,r] | x[T-1-t,r]]
    lens_ref: (RB, 1) int32        valid length per row (0 for padding rows)
    wih_ref : (2*NIN, 8*hid) bf16  block-diag input weights, gates [i_f i_b f_f f_b g_f g_b o_f o_b]
    whh_ref : (2*hid, 8*hid) f32   block-diag recurrent weights
    b_ref   : (1, 8*hid) f32       fused bias (b_ih + b_hh for real checkpoints)
    out_ref : (RB, 2*hid) f32      final hidden [h_fwd | h_bwd]
    xg_ref  : (T, RB, 8*hid) f32   VMEM scratch: precomputed per-step gate inputs
    """
    H = hid
    T = seq_len
    rb = out_ref.shape[0]
    nin2 = x_ref.shape[-1]

    # Hoisted, batched input projection: every timestep x both directions in one bf16 MXU pass.
    # Because x rows are [fwd | time-reversed] and wih is block-diagonal, xg_ref[s] is exactly
    # the gate input of step s for BOTH directions -> nothing to select inside the recurrence.
    x2d = x_ref[...].reshape(T * rb, nin2).astype(jnp.bfloat16)
    xg = jnp.dot(x2d, wih_ref[...], preferred_element_type=jnp.float32) + b_ref[...]
    xg_ref[...] = xg.reshape(T, rb, 8 * H)

    whh = whh_ref[...]                                              # f32, resident for all steps

    # Loop-invariant masks / thresholds (hoisted out of the serial body).
    lane = jax.lax.broadcasted_iota(jnp.int32, (rb, 2 * H), 1)
    bwd_state = lane >= H                                           # backward half of [h_f | h_b]
    lens_b = jnp.broadcast_to(lens_ref[...], (rb, 2 * H))           # (RB, 2H) int32
    t_base = jnp.where(bwd_state, T - 1, 0).astype(jnp.int32)
    t_sign = jnp.where(bwd_state, -1, 1).astype(jnp.int32)

    h0 = jnp.zeros((rb, 2 * H), jnp.float32)                        # [h_f | h_b]
    c0 = jnp.zeros((rb, 2 * H), jnp.float32)                        # [c_f | c_b]

    # One time loop drives BOTH directions:
    #   forward  consumes timestep s          (rows with s         < len update)
    #   backward consumes timestep T - 1 - s  (rows with T - 1 - s < len update)
    # which reproduces pack_padded_sequence(enforce_sorted=False) final-state semantics.
    def step(s, carry):
        h, c = carry
        gates = xg_ref[s] + jnp.dot(h, whh, preferred_element_type=jnp.float32)
        sg = jax.nn.sigmoid(gates)                                  # EUP; own issue slot
        th = jnp.tanh(gates)
        i_g = sg[:, 0 * 2 * H:1 * 2 * H]                            # [i_f | i_b] aligns with [c_f | c_b]
        f_g = sg[:, 1 * 2 * H:2 * 2 * H]
        g_g = th[:, 2 * 2 * H:3 * 2 * H]
        o_g = sg[:, 3 * 2 * H:4 * 2 * H]
        c_new = f_g * c + i_g * g_g
        h_new = o_g * jnp.tanh(c_new)
        upd = lens_b > (t_base + t_sign * s)                        # (RB, 2H) bool
        return jnp.where(upd, h_new, h), jnp.where(upd, c_new, c)

    if seq_len <= 8:                                                # tiny T: full static unroll
        carry = (h0, c0)
        for s in range(seq_len):
            carry = step(s, carry)
        h_fin = carry[0]
    else:                                                           # production T: bounded live ranges
        h_fin, _ = jax.lax.fori_loop(0, seq_len, step, (h0, c0), unroll=4)

    out_ref[...] = h_fin


# ----------------------- parameter prep (done once) -----------------------
def _interleave_gates(wf, wb, hid):
    """Interleave the per-gate column blocks of the two directions: (..., 4H) x2 -> (..., 8H)."""
    f4 = wf.reshape(wf.shape[:-1] + (4, hid))
    b4 = wb.reshape(wb.shape[:-1] + (4, hid))
    return jnp.concatenate([f4, b4], axis=-1).reshape(wf.shape[:-1] + (8 * hid,))


def fuse_bilstm_params(raw, hid):
    """Build the fused kernel weights ONCE (outside jit)."""
    f32 = jnp.float32
    # Input weights: block-diagonal over directions so that rows 0:NIN feed the forward lane
    # blocks and rows NIN:2*NIN feed the backward lane blocks.  Stored bf16 (MXU operands).
    wih_top = _interleave_gates(raw['wih_f'].astype(f32),
                                jnp.zeros_like(raw['wih_b'], dtype=f32), hid)
    wih_bot = _interleave_gates(jnp.zeros_like(raw['wih_f'], dtype=f32),
                                raw['wih_b'].astype(f32), hid)
    wih2 = jnp.concatenate([wih_top, wih_bot], axis=0).astype(jnp.bfloat16)

    # Recurrent weights: block-diagonal, kept f32 (they sit on the h->h critical path).
    whh_top = _interleave_gates(raw['whh_f'].astype(f32),
                                jnp.zeros_like(raw['whh_b'], dtype=f32), hid)
    whh_bot = _interleave_gates(jnp.zeros_like(raw['whh_f'], dtype=f32),
                                raw['whh_b'].astype(f32), hid)
    whh = jnp.concatenate([whh_top, whh_bot], axis=0)

    # NOTE: for real PyTorch checkpoints this must be b_ih + b_hh per direction.
    b = _interleave_gates(raw['b_f'].astype(f32), raw['b_b'].astype(f32), hid)
    return {'wih_cat': wih2, 'whh_cat': whh, 'b_cat': b.reshape(1, -1)}


def init_params(key):
    std = 1.0 / math.sqrt(HID)
    ks = jax.random.split(key, 6)
    u = lambda k, s: jax.random.uniform(k, s, jnp.float32, -std, std)
    return {
        'wih_f': u(ks[0], (NHID, 4 * HID)), 'whh_f': u(ks[1], (HID, 4 * HID)), 'b_f': u(ks[2], (4 * HID,)),
        'wih_b': u(ks[3], (NHID, 4 * HID)), 'whh_b': u(ks[4], (HID, 4 * HID)), 'b_b': u(ks[5], (4 * HID,)),
    }


# ------------------------------ forward pass ------------------------------
def bilstm_forward(fused, inp, mask, ent_len):
    """inp: (NE, T, nhid) float; mask: (NE, T), 0 = valid token; ent_len: static list[int]."""
    NE, T, NIN = inp.shape
    H = NIN // 2
    lens = jnp.sum((mask == 0).astype(jnp.int32), axis=-1).astype(jnp.int32)     # (NE,)

    rb = ROW_BLOCK
    nep = ((NE + rb - 1) // rb) * rb                              # pad rows to row-block multiple
    x = jnp.zeros((nep, T, NIN), jnp.float32).at[:NE].set(inp.astype(jnp.float32))
    lens_p = jnp.zeros((nep, 1), jnp.int32).at[:NE, 0].set(lens)
    x_tm = jnp.transpose(x, (1, 0, 2))                            # (T, nep, NIN) time-major
    x2 = jnp.concatenate([x_tm, x_tm[::-1]], axis=-1)             # [fwd | time-reversed] per row

    kern = functools.partial(_bilstm_kernel, seq_len=T, hid=H)
    h_cat = pl.pallas_call(
        kern,
        out_shape=jax.ShapeDtypeStruct((nep, 2 * H), jnp.float32),
        grid_spec=pltpu.PrefetchScalarGridSpec(
            num_scalar_prefetch=0,
            grid=(nep // rb,),                                    # entity-row blocks: independent
            in_specs=[
                pl.BlockSpec((T, rb, 2 * NIN), lambda i: (0, i, 0)),
                pl.BlockSpec((rb, 1), lambda i: (i, 0)),
                pl.BlockSpec((2 * NIN, 8 * H), lambda i: (0, 0)),  # weights: constant index_map
                pl.BlockSpec((2 * H, 8 * H), lambda i: (0, 0)),
                pl.BlockSpec((1, 8 * H), lambda i: (0, 0)),
            ],
            out_specs=pl.BlockSpec((rb, 2 * H), lambda i: (i, 0)),
            scratch_shapes=[pltpu.VMEM((T, rb, 8 * H), jnp.float32)],
        ),
        compiler_params=pltpu.CompilerParams(dimension_semantics=("parallel",)),
    )(x2, lens_p, fused['wih_cat'], fused['whh_cat'], fused['b_cat'])
    h_cat = h_cat[:NE]                                            # (NE, nhid) = [h_fwd | h_bwd]

    # pad(_h.split(ent_len)): layout plumbing with static ent_len, done in plain JAX.
    B, max_ent = len(ent_len), max(ent_len)
    ret = jnp.zeros((B, max_ent, NIN), jnp.float32)
    off = 0
    for i, n in enumerate(ent_len):
        ret = ret.at[i, :n].set(h_cat[off:off + n])
        off += n
    return ret


run = jax.jit(lambda fused, inp, mask: bilstm_forward(fused, inp, mask, ENT_LEN))


# ------------------------- pure-JAX reference -----------------------------
def bilstm_ref(raw, inp, mask, ent_len):
    NE, T, NIN = inp.shape
    H = NIN // 2
    lens = jnp.sum((mask == 0).astype(jnp.int32), axis=-1)

    def run_dir(wih, whh, b, reverse):
        h = jnp.zeros((NE, H), jnp.float32)
        c = jnp.zeros((NE, H), jnp.float32)
        ts = range(T - 1, -1, -1) if reverse else range(T)
        for t in ts:
            g = inp[:, t].astype(jnp.float32) @ wih + h @ whh + b
            i = jax.nn.sigmoid(g[:, :H]); f = jax.nn.sigmoid(g[:, H:2 * H])
            gg = jnp.tanh(g[:, 2 * H:3 * H]); o = jax.nn.sigmoid(g[:, 3 * H:])
            c_n = f * c + i * gg
            h_n = o * jnp.tanh(c_n)
            upd = (t < lens)[:, None]
            h = jnp.where(upd, h_n, h)
            c = jnp.where(upd, c_n, c)
        return h

    hf = run_dir(raw['wih_f'], raw['whh_f'], raw['b_f'], False)
    hb = run_dir(raw['wih_b'], raw['whh_b'], raw['b_b'], True)
    h_cat = jnp.concatenate([hf, hb], axis=-1)
    B, max_ent = len(ent_len), max(ent_len)
    ret = jnp.zeros((B, max_ent, NIN), jnp.float32)
    off = 0
    for i, n in enumerate(ent_len):
        ret = ret.at[i, :n].set(h_cat[off:off + n])
        off += n
    return ret


# ---------------------------------- main ----------------------------------
if __name__ == "__main__":
    key = jax.random.PRNGKey(0)
    k_p, k_x = jax.random.split(key)
    raw = init_params(k_p)
    fused = fuse_bilstm_params(raw, HID)

    NE = sum(ENT_LEN)                      # 5 entity token sequences
    T = 4                                  # max tokens per entity
    tok_lens = np.array([3, 2, 4, 1, 3], np.int32)
    inp = jax.random.normal(k_x, (NE, T, NHID), jnp.float32)
    # mask convention of the spec: 0 = valid token, nonzero = padding
    mask = jnp.asarray((np.arange(T)[None, :] >= tok_lens[:, None]).astype(np.float32))

    out = run(fused, inp, mask)
    jax.block_until_ready(out)

    ref = bilstm_ref(raw, inp, mask, ENT_LEN)
    assert out.shape == (len(ENT_LEN), max(ENT_LEN), NHID)
    assert bool(jnp.isfinite(out).all())
    # Tolerance loosened vs the all-f32 version: the hoisted input projection uses bf16 MXU
    # operands (the recurrent matmul stays f32).
    np.testing.assert_allclose(np.asarray(out), np.asarray(ref), rtol=3e-2, atol=3e-2)
    print("KERNEL_OK")
</pallas_src>

<mosaic_0001>
module attributes {stable_mosaic.version = 11 : i64} {
  func.func @_bilstm_kernel(%arg0: i32, %arg1: memref<4x8x64xf32, #tpu.memory_space<vmem>>, %arg2: memref<8x1xi32, #tpu.memory_space<vmem>>, %arg3: memref<64x128xbf16, #tpu.memory_space<vmem>>, %arg4: memref<32x128xf32, #tpu.memory_space<vmem>>, %arg5: memref<1x128xf32, #tpu.memory_space<vmem>>, %arg6: memref<8x32xf32, #tpu.memory_space<vmem>>, %arg7: memref<4x8x128xf32, #tpu.memory_space<vmem>>) attributes {dimension_semantics = [#tpu.dimension_semantics<parallel>], iteration_bounds = array<i64: 1>, scalar_prefetch = 0 : i64, scratch_operands = 1 : i64, tpu.core_type = #tpu.core_type<tc>, window_params = [{transform_indices = @transform_0, window_bounds = array<i64: 4, 8, 64>}, {transform_indices = @transform_1, window_bounds = array<i64: 8, 1>}, {pipeline_mode = #tpu.pipeline_mode<synchronous>, transform_indices = @transform_2, window_bounds = array<i64: 64, 128>}, {pipeline_mode = #tpu.pipeline_mode<synchronous>, transform_indices = @transform_3, window_bounds = array<i64: 32, 128>}, {pipeline_mode = #tpu.pipeline_mode<synchronous>, transform_indices = @transform_4, window_bounds = array<i64: 1, 128>}, {transform_indices = @transform_5, window_bounds = array<i64: 8, 32>}]} {
    %c0 = arith.constant 0 : index
    %c0_0 = arith.constant 0 : index
    %c0_1 = arith.constant 0 : index
    %0 = vector.load %arg1[%c0, %c0_0, %c0_1] : memref<4x8x64xf32, #tpu.memory_space<vmem>>, vector<4x8x64xf32>
    %1 = vector.shape_cast %0 : vector<4x8x64xf32> to vector<32x64xf32>
    %2 = arith.truncf %1 : vector<32x64xf32> to vector<32x64xbf16>
    %c0_2 = arith.constant 0 : index
    %c0_3 = arith.constant 0 : index
    %3 = vector.load %arg3[%c0_2, %c0_3] : memref<64x128xbf16, #tpu.memory_space<vmem>>, vector<64x128xbf16>
    %cst = arith.constant dense<0.000000e+00> : vector<32x128xf32>
    %4 = tpu.matmul %2, %3, %cst {dimension_numbers = #tpu.dot_dimension_numbers<[1], [0], [0], [1], [0, 0, 1, 1], [], []>} : vector<32x64xbf16>, vector<64x128xbf16>, vector<32x128xf32> -> vector<32x128xf32>
    %c0_4 = arith.constant 0 : index
    %c0_5 = arith.constant 0 : index
    %5 = vector.load %arg5[%c0_4, %c0_5] : memref<1x128xf32, #tpu.memory_space<vmem>>, vector<1x128xf32>
    %6 = vector.broadcast %5 : vector<1x128xf32> to vector<32x128xf32>
    %7 = arith.addf %4, %6 : vector<32x128xf32>
    %8 = vector.shape_cast %7 : vector<32x128xf32> to vector<4x8x128xf32>
    %c0_6 = arith.constant 0 : index
    %c0_7 = arith.constant 0 : index
    %c0_8 = arith.constant 0 : index
    %9 = vector.load %arg7[%c0_6, %c0_7, %c0_8] : memref<4x8x128xf32, #tpu.memory_space<vmem>>, vector<4x8x128xf32>
    tpu.vector_store %arg7[%c0_6, %c0_7, %c0_8], %8 {strides = array<i32>} : memref<4x8x128xf32, #tpu.memory_space<vmem>>, vector<4x8x128xf32>,
    %c0_9 = arith.constant 0 : index
    %c0_10 = arith.constant 0 : index
    %10 = vector.load %arg4[%c0_9, %c0_10] : memref<32x128xf32, #tpu.memory_space<vmem>>, vector<32x128xf32>
    %11 = tpu.iota {dimensions = array<i32: 1>} : vector<8x32xi32>
    %c16_i32 = arith.constant 16 : i32
    %12 = vector.broadcast %c16_i32 : i32 to vector<8x32xi32>
    %13 = arith.cmpi sge, %11, %12 : vector<8x32xi32>
    %c0_11 = arith.constant 0 : index
    %c0_12 = arith.constant 0 : index
    %14 = vector.load %arg2[%c0_11, %c0_12] : memref<8x1xi32, #tpu.memory_space<vmem>>, vector<8x1xi32>
    %15 = vector.shape_cast %14 : vector<8x1xi32> to vector<8x1xi32>
    %16 = vector.broadcast %15 : vector<8x1xi32> to vector<8x32xi32>
    %c3_i32 = arith.constant 3 : i32
    %c0_i32 = arith.constant 0 : i32
    %17 = vector.broadcast %c3_i32 : i32 to vector<8x32xi32>
    %18 = vector.broadcast %c0_i32 : i32 to vector<8x32xi32>
    %19 = arith.select %13, %17, %18 : vector<8x32xi1>, vector<8x32xi32>
    %c-1_i32 = arith.constant -1 : i32
    %c1_i32 = arith.constant 1 : i32
    %20 = vector.broadcast %c-1_i32 : i32 to vector<8x32xi32>
    %21 = vector.broadcast %c1_i32 : i32 to vector<8x32xi32>
    %22 = arith.select %13, %20, %21 : vector<8x32xi1>, vector<8x32xi32>
    %cst_13 = arith.constant 0.000000e+00 : f32
    %23 = vector.broadcast %cst_13 : f32 to vector<8x32xf32>
    %cst_14 = arith.constant 0.000000e+00 : f32
    %24 = vector.broadcast %cst_14 : f32 to vector<8x32xf32>
    %c0_15 = arith.constant 0 : index
    %c0_16 = arith.constant 0 : index
    %c0_17 = arith.constant 0 : index
    %25 = vector.load %arg7[%c0_15, %c0_16, %c0_17] : memref<4x8x128xf32, #tpu.memory_space<vmem>>, vector<1x8x128xf32>
    %26 = vector.shape_cast %25 : vector<1x8x128xf32> to vector<8x128xf32>
    %cst_18 = arith.constant dense<0.000000e+00> : vector<8x128xf32>
    %27 = tpu.matmul %23, %10, %cst_18 {dimension_numbers = #tpu.dot_dimension_numbers<[1], [0], [0], [1], [0, 0, 1, 1], [], []>} : vector<8x32xf32>, vector<32x128xf32>, vector<8x128xf32> -> vector<8x128xf32>
    %28 = arith.addf %26, %27 : vector<8x128xf32>
    %29 = arith.negf %28 : vector<8x128xf32>
    %30 = math.exp %29 : vector<8x128xf32>
    %cst_19 = arith.constant 1.000000e+00 : f32
    %31 = vector.broadcast %cst_19 : f32 to vector<8x128xf32>
    %32 = arith.addf %31, %30 : vector<8x128xf32>
    %33 = arith.divf %31, %32 : vector<8x128xf32>
    %34 = math.tanh %28 : vector<8x128xf32>
    %35 = vector.extract_strided_slice %33 {offsets = [0, 0], sizes = [8, 32], strides = [1, 1]} : vector<8x128xf32> to vector<8x32xf32>
    %36 = vector.extract_strided_slice %33 {offsets = [0, 32], sizes = [8, 32], strides = [1, 1]} : vector<8x128xf32> to vector<8x32xf32>
    %37 = vector.extract_strided_slice %34 {offsets = [0, 64], sizes = [8, 32], strides = [1, 1]} : vector<8x128xf32> to vector<8x32xf32>
    %38 = vector.extract_strided_slice %33 {offsets = [0, 96], sizes = [8, 32], strides = [1, 1]} : vector<8x128xf32> to vector<8x32xf32>
    %39 = arith.mulf %36, %24 : vector<8x32xf32>
    %40 = arith.mulf %35, %37 : vector<8x32xf32>
    %41 = arith.addf %39, %40 : vector<8x32xf32>
    %42 = math.tanh %41 : vector<8x32xf32>
    %43 = arith.mulf %38, %42 : vector<8x32xf32>
    %c0_i32_20 = arith.constant 0 : i32
    %44 = vector.broadcast %c0_i32_20 : i32 to vector<8x32xi32>
    %45 = arith.muli %22, %44 : vector<8x32xi32>
    %46 = arith.addi %19, %45 : vector<8x32xi32>
    %47 = arith.cmpi sgt, %16, %46 : vector<8x32xi32>
    %48 = arith.select %47, %43, %23 : vector<8x32xi1>, vector<8x32xf32>
    %49 = arith.select %47, %41, %24 : vector<8x32xi1>, vector<8x32xf32>
    %c1 = arith.constant 1 : index
    %c0_21 = arith.constant 0 : index
    %c0_22 = arith.constant 0 : index
    %50 = vector.load %arg7[%c1, %c0_21, %c0_22] : memref<4x8x128xf32, #tpu.memory_space<vmem>>, vector<1x8x128xf32>
    %51 = vector.shape_cast %50 : vector<1x8x128xf32> to vector<8x128xf32>
    %cst_23 = arith.constant dense<0.000000e+00> : vector<8x128xf32>
    %52 = tpu.matmul %48, %10, %cst_23 {dimension_numbers = #tpu.dot_dimension_numbers<[1], [0], [0], [1], [0, 0, 1, 1], [], []>} : vector<8x32xf32>, vector<32x128xf32>, vector<8x128xf32> -> vector<8x128xf32>
    %53 = arith.addf %51, %52 : vector<8x128xf32>
    %54 = arith.negf %53 : vector<8x128xf32>
    %55 = math.exp %54 : vector<8x128xf32>
    %cst_24 = arith.constant 1.000000e+00 : f32
    %56 = vector.broadcast %cst_24 : f32 to vector<8x128xf32>
    %57 = arith.addf %56, %55 : vector<8x128xf32>
    %58 = arith.divf %56, %57 : vector<8x128xf32>
    %59 = math.tanh %53 : vector<8x128xf32>
    %60 = vector.extract_strided_slice %58 {offsets = [0, 0], sizes = [8, 32], strides = [1, 1]} : vector<8x128xf32> to vector<8x32xf32>
    %61 = vector.extract_strided_slice %58 {offsets = [0, 32], sizes = [8, 32], strides = [1, 1]} : vector<8x128xf32> to vector<8x32xf32>
    %62 = vector.extract_strided_slice %59 {offsets = [0, 64], sizes = [8, 32], strides = [1, 1]} : vector<8x128xf32> to vector<8x32xf32>
    %63 = vector.extract_strided_slice %58 {offsets = [0, 96], sizes = [8, 32], strides = [1, 1]} : vector<8x128xf32> to vector<8x32xf32>
    %64 = arith.mulf %61, %49 : vector<8x32xf32>
    %65 = arith.mulf %60, %62 : vector<8x32xf32>
    %66 = arith.addf %64, %65 : vector<8x32xf32>
    %67 = math.tanh %66 : vector<8x32xf32>
    %68 = arith.mulf %63, %67 : vector<8x32xf32>
    %c1_i32_25 = arith.constant 1 : i32
    %69 = vector.broadcast %c1_i32_25 : i32 to vector<8x32xi32>
    %70 = arith.muli %22, %69 : vector<8x32xi32>
    %71 = arith.addi %19, %70 : vector<8x32xi32>
    %72 = arith.cmpi sgt, %16, %71 : vector<8x32xi32>
    %73 = arith.select %72, %68, %48 : vector<8x32xi1>, vector<8x32xf32>
    %74 = arith.select %72, %66, %49 : vector<8x32xi1>, vector<8x32xf32>
    %c2 = arith.constant 2 : index
    %c0_26 = arith.constant 0 : index
    %c0_27 = arith.constant 0 : index
    %75 = vector.load %arg7[%c2, %c0_26, %c0_27] : memref<4x8x128xf32, #tpu.memory_space<vmem>>, vector<1x8x128xf32>
    %76 = vector.shape_cast %75 : vector<1x8x128xf32> to vector<8x128xf32>
    %cst_28 = arith.constant dense<0.000000e+00> : vector<8x128xf32>
    %77 = tpu.matmul %73, %10, %cst_28 {dimension_numbers = #tpu.dot_dimension_numbers<[1], [0], [0], [1], [0, 0, 1, 1], [], []>} : vector<8x32xf32>, vector<32x128xf32>, vector<8x128xf32> -> vector<8x128xf32>
    %78 = arith.addf %76, %77 : vector<8x128xf32>
    %79 = arith.negf %78 : vector<8x128xf32>
    %80 = math.exp %79 : vector<8x128xf32>
    %cst_29 = arith.constant 1.000000e+00 : f32
    %81 = vector.broadcast %cst_29 : f32 to vector<8x128xf32>
    %82 = arith.addf %81, %80 : vector<8x128xf32>
    %83 = arith.divf %81, %82 : vector<8x128xf32>
    %84 = math.tanh %78 : vector<8x128xf32>
    %85 = vector.extract_strided_slice %83 {offsets = [0, 0], sizes = [8, 32], strides = [1, 1]} : vector<8x128xf32> to vector<8x32xf32>
    %86 = vector.extract_strided_slice %83 {offsets = [0, 32], sizes = [8, 32], strides = [1, 1]} : vector<8x128xf32> to vector<8x32xf32>
    %87 = vector.extract_strided_slice %84 {offsets = [0, 64], sizes = [8, 32], strides = [1, 1]} : vector<8x128xf32> to vector<8x32xf32>
    %88 = vector.extract_strided_slice %83 {offsets = [0, 96], sizes = [8, 32], strides = [1, 1]} : vector<8x128xf32> to vector<8x32xf32>
    %89 = arith.mulf %86, %74 : vector<8x32xf32>
    %90 = arith.mulf %85, %87 : vector<8x32xf32>
    %91 = arith.addf %89, %90 : vector<8x32xf32>
    %92 = math.tanh %91 : vector<8x32xf32>
    %93 = arith.mulf %88, %92 : vector<8x32xf32>
    %c2_i32 = arith.constant 2 : i32
    %94 = vector.broadcast %c2_i32 : i32 to vector<8x32xi32>
    %95 = arith.muli %22, %94 : vector<8x32xi32>
    %96 = arith.addi %19, %95 : vector<8x32xi32>
    %97 = arith.cmpi sgt, %16, %96 : vector<8x32xi32>
    %98 = arith.select %97, %93, %73 : vector<8x32xi1>, vector<8x32xf32>
    %99 = arith.select %97, %91, %74 : vector<8x32xi1>, vector<8x32xf32>
    %c3 = arith.constant 3 : index
    %c0_30 = arith.constant 0 : index
    %c0_31 = arith.constant 0 : index
    %100 = vector.load %arg7[%c3, %c0_30, %c0_31] : memref<4x8x128xf32, #tpu.memory_space<vmem>>, vector<1x8x128xf32>
    %101 = vector.shape_cast %100 : vector<1x8x128xf32> to vector<8x128xf32>
    %cst_32 = arith.constant dense<0.000000e+00> : vector<8x128xf32>
    %102 = tpu.matmul %98, %10, %cst_32 {dimension_numbers = #tpu.dot_dimension_numbers<[1], [0], [0], [1], [0, 0, 1, 1], [], []>} : vector<8x32xf32>, vector<32x128xf32>, vector<8x128xf32> -> vector<8x128xf32>
    %103 = arith.addf %101, %102 : vector<8x128xf32>
    %104 = arith.negf %103 : vector<8x128xf32>
    %105 = math.exp %104 : vector<8x128xf32>
    %cst_33 = arith.constant 1.000000e+00 : f32
    %106 = vector.broadcast %cst_33 : f32 to vector<8x128xf32>
    %107 = arith.addf %106, %105 : vector<8x128xf32>
    %108 = arith.divf %106, %107 : vector<8x128xf32>
    %109 = math.tanh %103 : vector<8x128xf32>
    %110 = vector.extract_strided_slice %108 {offsets = [0, 0], sizes = [8, 32], strides = [1, 1]} : vector<8x128xf32> to vector<8x32xf32>
    %111 = vector.extract_strided_slice %108 {offsets = [0, 32], sizes = [8, 32], strides = [1, 1]} : vector<8x128xf32> to vector<8x32xf32>
    %112 = vector.extract_strided_slice %109 {offsets = [0, 64], sizes = [8, 32], strides = [1, 1]} : vector<8x128xf32> to vector<8x32xf32>
    %113 = vector.extract_strided_slice %108 {offsets = [0, 96], sizes = [8, 32], strides = [1, 1]} : vector<8x128xf32> to vector<8x32xf32>
    %114 = arith.mulf %111, %99 : vector<8x32xf32>
    %115 = arith.mulf %110, %112 : vector<8x32xf32>
    %116 = arith.addf %114, %115 : vector<8x32xf32>
    %117 = math.tanh %116 : vector<8x32xf32>
    %118 = arith.mulf %113, %117 : vector<8x32xf32>
    %c3_i32_34 = arith.constant 3 : i32
    %119 = vector.broadcast %c3_i32_34 : i32 to vector<8x32xi32>
    %120 = arith.muli %22, %119 : vector<8x32xi32>
    %121 = arith.addi %19, %120 : vector<8x32xi32>
    %122 = arith.cmpi sgt, %16, %121 : vector<8x32xi32>
    %123 = arith.select %122, %118, %98 : vector<8x32xi1>, vector<8x32xf32>
    %c0_35 = arith.constant 0 : index
    %c0_36 = arith.constant 0 : index
    %124 = vector.load %arg6[%c0_35, %c0_36] : memref<8x32xf32, #tpu.memory_space<vmem>>, vector<8x32xf32>
    tpu.vector_store %arg6[%c0_35, %c0_36], %123 {strides = array<i32>} : memref<8x32xf32, #tpu.memory_space<vmem>>, vector<8x32xf32>,
    return
  }
  func.func @transform_0(%arg0: i32) -> (i32, i32, i32) {
    %c0_i32 = arith.constant 0 : i32
    %c0_i32_0 = arith.constant 0 : i32
    %c0_i32_1 = arith.constant 0 : i32
    return %c0_i32, %arg0, %c0_i32_0 : i32, i32, i32
  }
  func.func @transform_1(%arg0: i32) -> (i32, i32) {
    %c0_i32 = arith.constant 0 : i32
    %c0_i32_0 = arith.constant 0 : i32
    return %arg0, %c0_i32 : i32, i32
  }
  func.func @transform_2(%arg0: i32) -> (i32, i32) {
    %c0_i32 = arith.constant 0 : i32
    %c0_i32_0 = arith.constant 0 : i32
    %c0_i32_1 = arith.constant 0 : i32
    return %c0_i32, %c0_i32_0 : i32, i32
  }
  func.func @transform_3(%arg0: i32) -> (i32, i32) {
    %c0_i32 = arith.constant 0 : i32
    %c0_i32_0 = arith.constant 0 : i32
    %c0_i32_1 = arith.constant 0 : i32
    return %c0_i32, %c0_i32_0 : i32, i32
  }
  func.func @transform_4(%arg0: i32) -> (i32, i32) {
    %c0_i32 = arith.constant 0 : i32
    %c0_i32_0 = arith.constant 0 : i32
    %c0_i32_1 = arith.constant 0 : i32
    return %c0_i32, %c0_i32_0 : i32, i32
  }
  func.func @transform_5(%arg0: i32) -> (i32, i32) {
    %c0_i32 = arith.constant 0 : i32
    %c0_i32_0 = arith.constant 0 : i32
    return %arg0, %c0_i32 : i32, i32
  }
}

</mosaic_0001>

<llo_original>
// kernel: _lambda_.1
$region0: #{_lambda_.1}
  #allocation0 [shape = 'u32[]', space=smem, size = 0x4, offset = 0x4, fixed_abs, tag = 'smem constant byte address 0x4 - core index']
  #allocation1 [shape = 'u32[144,128]{1,0:T(1,128)}', space=vmem, size = 0x12000, scoped, tag = 'internal scratch']
  #allocation2 [shape = 'f32[4,8,128]{2,1,0:T(8,128)}', space=vmem, size = 0x4000, scoped, tag = 'scratch operand']
  %s0 = inlined_call_operand.vmem [shape: f32[4,8,64], index: 0, kind: input, shape index: {}]
  %s1 = inlined_call_operand.vmem [shape: s32[8,1], index: 1, kind: input, shape index: {}]
  %s2 = inlined_call_operand.vmem [shape: bf16[64,128], index: 2, kind: input, shape index: {}]
  %s3 = inlined_call_operand.vmem [shape: f32[32,128], index: 3, kind: input, shape index: {}]
  %s4 = inlined_call_operand.vmem [shape: f32[1,128], index: 4, kind: input, shape index: {}]
  %s5 = inlined_call_operand.vmem [shape: f32[8,32], index: 5, kind: output, shape index: {}]
  %s6 = sld [smem:[#allocation0]]
  $region30: #{_lambda_.1} parent=0
    _
  %s8 = ssub.s32 1, %s6
  %s9 = scalar_select 0, %s8, %s6
  // Predicated region
  $region2: #{_lambda_.1} parent=0 // pred_check
    _
  $region3: #{_lambda_.1} parent=0 // pred_check_branch
    %11 = sbr.rel (0) target = $region5
  $region4: #{_lambda_.1} parent=0 // pred_region
    _
  $region5: #{_lambda_.1} parent=0 // pred_fallthru
    _
  // Predicated region
  $region6: #{_lambda_.1} parent=0 // pred_check
    _
  $region7: #{_lambda_.1} parent=0 // pred_check_branch
    %13 = sbr.rel (0) target = $region9
  $region8: #{_lambda_.1} parent=0 // pred_region
    _
  $region9: #{_lambda_.1} parent=0 // pred_fallthru
    _
  // Predicated region
  $region10: #{_lambda_.1} parent=0 // pred_check
    _
  $region11: #{_lambda_.1} parent=0 // pred_check_branch
    %15 = sbr.rel (0) target = $region13
  $region12: #{_lambda_.1} parent=0 // pred_region
    _
  $region13: #{_lambda_.1} parent=0 // pred_fallthru
    _
  // Predicated region
  $region14: #{_lambda_.1} parent=0 // pred_check
    _
  $region15: #{_lambda_.1} parent=0 // pred_check_branch
    %17 = sbr.rel (0) target = $region17
  $region16: #{_lambda_.1} parent=0 // pred_region
    _
  $region17: #{_lambda_.1} parent=0 // pred_fallthru
    _
  // Predicated region
  $region18: #{_lambda_.1} parent=0 // pred_check
    _
  $region19: #{_lambda_.1} parent=0 // pred_check_branch
    %19 = sbr.rel (0) target = $region21
  $region20: #{_lambda_.1} parent=0 // pred_region
    _
  $region21: #{_lambda_.1} parent=0 // pred_fallthru
    _
  %v21 = vld [vmem:[%s0] sm:$0xff]
  %v22 = vld [vmem:[%s0 + $0x8] sm:$0xff]
  %v23 = vld [vmem:[%s0 + $0x10] sm:$0xff]
  %v24 = vld [vmem:[%s0 + $0x18] sm:$0xff]
  %v25 = vpack.c.bf16 %v22, %v21
  %v26 = vpack.c.bf16 %v24, %v23
  %v27 = vld [vmem:[%s2] sm:$0xf]
  %v28 = vld [vmem:[%s2 + $0x4] sm:$0xf]
  %v29 = vld [vmem:[%s2 + $0x8] sm:$0xf]
  %v30 = vld [vmem:[%s2 + $0xc] sm:$0xf]
  %v31 = vld [vmem:[%s2 + $0x10] sm:$0xf]
  %v32 = vld [vmem:[%s2 + $0x14] sm:$0xf]
  %v33 = vld [vmem:[%s2 + $0x18] sm:$0xf]
  %v34 = vld [vmem:[%s2 + $0x1c] sm:$0xf]
  %v35 = vld [vmem:[%s4] sm:$0x1]
  %v37 = vlaneseq
  %v38 = vshrl.u32 %v37, 7
  %v39 = vsub.s32 0, %v38
  %v40 = vrot.slane %v35, %v39
  %v50 = vunpack.c.l.b16 %v27
  %v51 = vunpack.c.l.b16 %v28
  %v52 = vunpack.c.l.b16 %v29
  %v53 = vunpack.c.l.b16 %v30
  %v54 = vunpack.c.l.b16 %v31
  %v55 = vunpack.c.l.b16 %v32
  %v56 = vunpack.c.l.b16 %v33
  %v57 = vunpack.c.l.b16 %v34
  %v58 = vpack.c.b16 %v51, %v50
  %v59 = vpack.c.b16 %v53, %v52
  %v60 = vpack.c.b16 %v55, %v54
  %v61 = vpack.c.b16 %v57, %v56
  %vm66 = vcmask 523264
  %v68 = vsel %vm66, %v25, 0
  %v71 = vsel %vm66, %v26, 0
  %73 = vmatprep.subr.bf16.mxu0 0
  %74 = vmatpush1.bf16.msra.mxu0 %v58
  %75 = vmatprep.subr.bf16.mxu0 0
  %76 = vmatpush1.bf16.msra.mxu0 %v59
  %77 = vmatprep.subr.bf16.mxu0 0
  %78 = vmatpush1.bf16.msra.mxu0 %v60
  %79 = vmatprep.subr.bf16.mxu0 0
  %80 = vmatpush1.bf16.msra.mxu0 %v61
  %81 = vmatprep.subr.bf16.mxu0 0
  %82 = vmatpush1.bf16.msra.mxu0 0
  %83 = vmatprep.subr.bf16.mxu0 0
  %84 = vmatpush1.bf16.msra.mxu0 0
  %85 = vmatprep.subr.bf16.mxu0 0
  %86 = vmatpush1.bf16.msra.mxu0 0
  %87 = vmatprep.subr.bf16.mxu0 0
  %88 = vmatpush1.bf16.msra.mxu0 0
  %89 = vmatprep.subr.bf16.mxu0 0
  %90 = vmatpush1.bf16.msra.mxu0 0
  %91 = vmatprep.subr.bf16.mxu0 0
  %92 = vmatpush1.bf16.msra.mxu0 0
  %93 = vmatprep.subr.bf16.mxu0 0
  %94 = vmatpush1.bf16.msra.mxu0 0
  %95 = vmatprep.subr.bf16.mxu0 0
  %96 = vmatpush1.bf16.msra.mxu0 0
  %97 = vmatprep.subr.bf16.mxu0 0
  %98 = vmatpush1.bf16.msra.mxu0 0
  %99 = vmatprep.subr.bf16.mxu0 0
  %100 = vmatpush1.bf16.msra.mxu0 0
  %101 = vmatprep.subr.bf16.mxu0 0
  %102 = vmatpush1.bf16.msra.mxu0 0
  %103 = vmatprep.subr.bf16.mxu0 0
  %104 = vmatpush1.bf16.msra.mxu0 0
  %105 = vmatprep.mubr.bf16.mxu0 0
  %106 = vmatmul.mubr.bf16.gmra.mrb[0].mxu0 %v68
  %v107 = vpop.f32.mrb[0].mxu0
  %v108 = vadd.f32 %v40, %v107
  %v109 = vpop.f32.mrb[0].mxu0
  %v110 = vpop.f32.mrb[0].mxu0
  %v111 = vadd.f32 %v40, %v110
  %v112 = vpop.f32.mrb[0].mxu0
  %113 = vmatprep.mubr.bf16.mxu0 0
  %114 = vmatmul.mubr.bf16.gmra.mrb[0].mxu0 %v71
  %v115 = vpop.f32.mrb[0].mxu0
  %v116 = vadd.f32 %v40, %v115
  %v117 = vpop.f32.mrb[0].mxu0
  %v118 = vpop.f32.mrb[0].mxu0
  %v119 = vadd.f32 %v40, %v118
  %v120 = vpop.f32.mrb[0].mxu0
  %121 = vdwg.mxu0
  %122 = vst [vmem:[#allocation2] sm:$0xff] %v108
  %123 = vst [vmem:[#allocation2 + $0x8] sm:$0xff] %v111
  %124 = vst [vmem:[#allocation2 + $0x10] sm:$0xff] %v116
  %125 = vst [vmem:[#allocation2 + $0x18] sm:$0xff] %v119
  %v126 = vld [vmem:[%s3] sm:$0xff]
  %v127 = vld [vmem:[%s3 + $0x8] sm:$0xff]
  %v128 = vld [vmem:[%s3 + $0x10] sm:$0xff]
  %v129 = vld [vmem:[%s3 + $0x18] sm:$0xff]
  %v130 = vlaneseq
  %v131 = vand.u32 %v130, 127
  %vm132 = vcmp.ge.s32.totalorder %v131, 16
  %v133 = vld [vmem:[%s1] sm:$0xff]
  %134 = vset.pattern.permute.xlu0 0
  %135 = vperm.xlu0 %134, %v133
  %v136 = vpop.permute.xlu0 %135
  %v137 = vsel %vm132, 3, 0
  %v138 = vsel %vm132, 4294967295, 1
  %v139 = vld [vmem:[#allocation2] sm:$0xff]
  %vm140 = vcmask 261120
  %v142 = vsel %vm140, 0.0, 0
  %144 = vmatprep.subr.mxu0 0.0
  %145 = vmatpush1.msra.mxu0 %v126
  %146 = vmatprep.subr.mxu0 0.0
  %147 = vmatpush1.msra.mxu0 %v127
  %148 = vmatprep.subr.mxu0 0.0
  %149 = vmatpush1.msra.mxu0 %v128
  %150 = vmatprep.subr.mxu0 0.0
  %151 = vmatpush1.msra.mxu0 %v129
  %152 = vmatprep.subr.mxu0 0.0
  %153 = vmatpush1.msra.mxu0 0.0
  %154 = vmatprep.subr.mxu0 0.0
  %155 = vmatpush1.msra.mxu0 0.0
  %156 = vmatprep.subr.mxu0 0.0
  %157 = vmatpush1.msra.mxu0 0.0
  %158 = vmatprep.subr.mxu0 0.0
  %159 = vmatpush1.msra.mxu0 0.0
  %160 = vmatprep.subr.mxu0 0.0
  %161 = vmatpush1.msra.mxu0 0.0
  %162 = vmatprep.subr.mxu0 0.0
  %163 = vmatpush1.msra.mxu0 0.0
  %164 = vmatprep.subr.mxu0 0.0
  %165 = vmatpush1.msra.mxu0 0.0
  %166 = vmatprep.subr.mxu0 0.0
  %167 = vmatpush1.msra.mxu0 0.0
  %168 = vmatprep.subr.mxu0 0.0
  %169 = vmatpush1.msra.mxu0 0.0
  %170 = vmatprep.subr.mxu0 0.0
  %171 = vmatpush1.msra.mxu0 0.0
  %172 = vmatprep.subr.mxu0 0.0
  %173 = vmatpush1.msra.mxu0 0.0
  %174 = vmatprep.subr.mxu0 0.0
  %175 = vmatpush1.msra.mxu0 0.0
  %176 = vmatprep.subr.mxu0 0.0
  %177 = vmatpush1.msra.mxu0 0.0
  %178 = vmatprep.subr.mxu0 0.0
  %179 = vmatpush1.msra.mxu0 0.0
  %180 = vmatprep.subr.mxu0 0.0
  %181 = vmatpush1.msra.mxu0 0.0
  %182 = vmatprep.subr.mxu0 0.0
  %183 = vmatpush1.msra.mxu0 0.0
  %184 = vmatprep.subr.mxu0 0.0
  %185 = vmatpush1.msra.mxu0 0.0
  %186 = vmatprep.subr.mxu0 0.0
  %187 = vmatpush1.msra.mxu0 0.0
  %188 = vmatprep.subr.mxu0 0.0
  %189 = vmatpush1.msra.mxu0 0.0
  %190 = vmatprep.subr.mxu0 0.0
  %191 = vmatpush1.msra.mxu0 0.0
  %192 = vmatprep.subr.mxu0 0.0
  %193 = vmatpush1.msra.mxu0 0.0
  %194 = vmatprep.subr.mxu0 0.0
  %195 = vmatpush1.msra.mxu0 0.0
  %196 = vmatprep.subr.mxu0 0.0
  %197 = vmatpush1.msra.mxu0 0.0
  %198 = vmatprep.subr.mxu0 0.0
  %199 = vmatpush1.msra.mxu0 0.0
  %200 = vmatprep.subr.mxu0 0.0
  %201 = vmatpush1.msra.mxu0 0.0
  %202 = vmatprep.subr.mxu0 0.0
  %203 = vmatpush1.msra.mxu0 0.0
  %204 = vmatprep.subr.mxu0 0.0
  %205 = vmatpush1.msra.mxu0 0.0
  %206 = vmatprep.subr.mxu0 0.0
  %207 = vmatpush1.msra.mxu0 0.0
  %208 = vmatprep.mubr.f32.mxu0 0.0
  %209 = vmatmul.mubr.f32.gmra.mrb[0].mxu0 %v142
  %v210 = vpop.f32.mrb[0].mxu0
  %v211 = vadd.f32 0.0, %v210
  %v212 = vpop.f32.mrb[0].mxu0
  %213 = vdwg.mxu0
  %v214 = vadd.f32 %v139, %v211
  %v215 = vxor.u32 %v214, 2147483648
  %v216 = vmul.f32 %v215, 1.442695
  %v217 = vpow.pop %v216
  %v218 = vadd.f32 %v217, 1.0
  %v219 = vrcp.pop %v218
  %v220 = vmul.f32 1.0, %v219
  %v221 = vtanh.pop %v214
  %v222 = vmul.f32 %v220, 0.0
  %224 = vrot.lane.b32.xlu0 %v221, 64
  %v225 = vpop.permute.xlu0 %224
  %v227 = vmul.f32 %v220, %v225
  %229 = vrot.lane.b32.xlu0 %v227, 32
  %v230 = vpop.permute.xlu0 %229
  %v232 = vadd.f32 %v222, %v230
  %v233 = vtanh.pop %v232
  %235 = vrot.lane.b32.xlu0 %v233, 64
  %v236 = vpop.permute.xlu0 %235
  %v238 = vmul.f32 %v220, %v236
  %vm239 = vcmp.gt.s32.totalorder %v136, %v137
  %241 = vrot.lane.b32.xlu0 %v238, 32
  %v242 = vpop.permute.xlu0 %241
  %v244 = vsel %vm239, %v242, 0.0
  %246 = vrot.lane.b32.xlu0 %v232, 96
  %v247 = vpop.permute.xlu0 %246
  %v249 = vsel %vm239, %v247, 0.0
  %s250 = scalar_lea.vmem [#allocation2], 8
  %v251 = vld [vmem:[%s250] sm:$0xff]
  %v253 = vsel %vm140, %v244, 0
  %255 = vmatprep.subr.mxu0 0.0
  %256 = vmatpush1.msra.mxu0 %v126
  %257 = vmatprep.subr.mxu0 0.0
  %258 = vmatpush1.msra.mxu0 %v127
  %259 = vmatprep.subr.mxu0 0.0
  %260 = vmatpush1.msra.mxu0 %v128
  %261 = vmatprep.subr.mxu0 0.0
  %262 = vmatpush1.msra.mxu0 %v129
  %263 = vmatprep.subr.mxu0 0.0
  %264 = vmatpush1.msra.mxu0 0.0
  %265 = vmatprep.subr.mxu0 0.0
  %266 = vmatpush1.msra.mxu0 0.0
  %267 = vmatprep.subr.mxu0 0.0
  %268 = vmatpush1.msra.mxu0 0.0
  %269 = vmatprep.subr.mxu0 0.0
  %270 = vmatpush1.msra.mxu0 0.0
  %271 = vmatprep.subr.mxu0 0.0
  %272 = vmatpush1.msra.mxu0 0.0
  %273 = vmatprep.subr.mxu0 0.0
  %274 = vmatpush1.msra.mxu0 0.0
  %275 = vmatprep.subr.mxu0 0.0
  %276 = vmatpush1.msra.mxu0 0.0
  %277 = vmatprep.subr.mxu0 0.0
  %278 = vmatpush1.msra.mxu0 0.0
  %279 = vmatprep.subr.mxu0 0.0
  %280 = vmatpush1.msra.mxu0 0.0
  %281 = vmatprep.subr.mxu0 0.0
  %282 = vmatpush1.msra.mxu0 0.0
  %283 = vmatprep.subr.mxu0 0.0
  %284 = vmatpush1.msra.mxu0 0.0
  %285 = vmatprep.subr.mxu0 0.0
  %286 = vmatpush1.msra.mxu0 0.0
  %287 = vmatprep.subr.mxu0 0.0
  %288 = vmatpush1.msra.mxu0 0.0
  %289 = vmatprep.subr.mxu0 0.0
  %290 = vmatpush1.msra.mxu0 0.0
  %291 = vmatprep.subr.mxu0 0.0
  %292 = vmatpush1.msra.mxu0 0.0
  %293 = vmatprep.subr.mxu0 0.0
  %294 = vmatpush1.msra.mxu0 0.0
  %295 = vmatprep.subr.mxu0 0.0
  %296 = vmatpush1.msra.mxu0 0.0
  %297 = vmatprep.subr.mxu0 0.0
  %298 = vmatpush1.msra.mxu0 0.0
  %299 = vmatprep.subr.mxu0 0.0
  %300 = vmatpush1.msra.mxu0 0.0
  %301 = vmatprep.subr.mxu0 0.0
  %302 = vmatpush1.msra.mxu0 0.0
  %303 = vmatprep.subr.mxu0 0.0
  %304 = vmatpush1.msra.mxu0 0.0
  %305 = vmatprep.subr.mxu0 0.0
  %306 = vmatpush1.msra.mxu0 0.0
  %307 = vmatprep.subr.mxu0 0.0
  %308 = vmatpush1.msra.mxu0 0.0
  %309 = vmatprep.subr.mxu0 0.0
  %310 = vmatpush1.msra.mxu0 0.0
  %311 = vmatprep.subr.mxu0 0.0
  %312 = vmatpush1.msra.mxu0 0.0
  %313 = vmatprep.subr.mxu0 0.0
  %314 = vmatpush1.msra.mxu0 0.0
  %315 = vmatprep.subr.mxu0 0.0
  %316 = vmatpush1.msra.mxu0 0.0
  %317 = vmatprep.subr.mxu0 0.0
  %318 = vmatpush1.msra.mxu0 0.0
  %319 = vmatprep.mubr.f32.mxu0 0.0
  %320 = vmatmul.mubr.f32.gmra.mrb[0].mxu0 %v253
  %v321 = vpop.f32.mrb[0].mxu0
  %v322 = vadd.f32 0.0, %v321
  %v323 = vpop.f32.mrb[0].mxu0
  %324 = vdwg.mxu0
  %v325 = vadd.f32 %v251, %v322
  %v326 = vxor.u32 %v325, 2147483648
  %v327 = vmul.f32 %v326, 1.442695
  %v328 = vpow.pop %v327
  %v329 = vadd.f32 %v328, 1.0
  %v330 = vrcp.pop %v329
  %v331 = vmul.f32 1.0, %v330
  %v332 = vtanh.pop %v325
  %334 = vrot.lane.b32.xlu0 %v249, 32
  %v335 = vpop.permute.xlu0 %334
  %v337 = vmul.f32 %v331, %v335
  %339 = vrot.lane.b32.xlu0 %v332, 64
  %v340 = vpop.permute.xlu0 %339
  %v342 = vmul.f32 %v331, %v340
  %344 = vrot.lane.b32.xlu0 %v342, 32
  %v345 = vpop.permute.xlu0 %344
  %v347 = vadd.f32 %v337, %v345
  %v348 = vtanh.pop %v347
  %350 = vrot.lane.b32.xlu0 %v348, 64
  %v351 = vpop.permute.xlu0 %350
  %v353 = vmul.f32 %v331, %v351
  %v354 = vadd.s32 %v137, %v138
  %vm355 = vcmp.gt.s32.totalorder %v136, %v354
  %357 = vrot.lane.b32.xlu0 %v353, 32
  %v358 = vpop.permute.xlu0 %357
  %v360 = vsel %vm355, %v358, %v244
  %362 = vrot.lane.b32.xlu0 %v347, 96
  %v363 = vpop.permute.xlu0 %362
  %v365 = vsel %vm355, %v363, %v249
  %s366 = scalar_lea.vmem [#allocation2], 16
  %v367 = vld [vmem:[%s366] sm:$0xff]
  %v369 = vsel %vm140, %v360, 0
  %371 = vmatprep.subr.mxu0 0.0
  %372 = vmatpush1.msra.mxu0 %v126
  %373 = vmatprep.subr.mxu0 0.0
  %374 = vmatpush1.msra.mxu0 %v127
  %375 = vmatprep.subr.mxu0 0.0
  %376 = vmatpush1.msra.mxu0 %v128
  %377 = vmatprep.subr.mxu0 0.0
  %378 = vmatpush1.msra.mxu0 %v129
  %379 = vmatprep.subr.mxu0 0.0
  %380 = vmatpush1.msra.mxu0 0.0
  %381 = vmatprep.subr.mxu0 0.0
  %382 = vmatpush1.msra.mxu0 0.0
  %383 = vmatprep.subr.mxu0 0.0
  %384 = vmatpush1.msra.mxu0 0.0
  %385 = vmatprep.subr.mxu0 0.0
  %386 = vmatpush1.msra.mxu0 0.0
  %387 = vmatprep.subr.mxu0 0.0
  %388 = vmatpush1.msra.mxu0 0.0
  %389 = vmatprep.subr.mxu0 0.0
  %390 = vmatpush1.msra.mxu0 0.0
  %391 = vmatprep.subr.mxu0 0.0
  %392 = vmatpush1.msra.mxu0 0.0
  %393 = vmatprep.subr.mxu0 0.0
  %394 = vmatpush1.msra.mxu0 0.0
  %395 = vmatprep.subr.mxu0 0.0
  %396 = vmatpush1.msra.mxu0 0.0
  %397 = vmatprep.subr.mxu0 0.0
  %398 = vmatpush1.msra.mxu0 0.0
  %399 = vmatprep.subr.mxu0 0.0
  %400 = vmatpush1.msra.mxu0 0.0
  %401 = vmatprep.subr.mxu0 0.0
  %402 = vmatpush1.msra.mxu0 0.0
  %403 = vmatprep.subr.mxu0 0.0
  %404 = vmatpush1.msra.mxu0 0.0
  %405 = vmatprep.subr.mxu0 0.0
  %406 = vmatpush1.msra.mxu0 0.0
  %407 = vmatprep.subr.mxu0 0.0
  %408 = vmatpush1.msra.mxu0 0.0
  %409 = vmatprep.subr.mxu0 0.0
  %410 = vmatpush1.msra.mxu0 0.0
  %411 = vmatprep.subr.mxu0 0.0
  %412 = vmatpush1.msra.mxu0 0.0
  %413 = vmatprep.subr.mxu0 0.0
  %414 = vmatpush1.msra.mxu0 0.0
  %415 = vmatprep.subr.mxu0 0.0
  %416 = vmatpush1.msra.mxu0 0.0
  %417 = vmatprep.subr.mxu0 0.0
  %418 = vmatpush1.msra.mxu0 0.0
  %419 = vmatprep.subr.mxu0 0.0
  %420 = vmatpush1.msra.mxu0 0.0
  %421 = vmatprep.subr.mxu0 0.0
  %422 = vmatpush1.msra.mxu0 0.0
  %423 = vmatprep.subr.mxu0 0.0
  %424 = vmatpush1.msra.mxu0 0.0
  %425 = vmatprep.subr.mxu0 0.0
  %426 = vmatpush1.msra.mxu0 0.0
  %427 = vmatprep.subr.mxu0 0.0
  %428 = vmatpush1.msra.mxu0 0.0
  %429 = vmatprep.subr.mxu0 0.0
  %430 = vmatpush1.msra.mxu0 0.0
  %431 = vmatprep.subr.mxu0 0.0
  %432 = vmatpush1.msra.mxu0 0.0
  %433 = vmatprep.subr.mxu0 0.0
  %434 = vmatpush1.msra.mxu0 0.0
  %435 = vmatprep.mubr.f32.mxu0 0.0
  %436 = vmatmul.mubr.f32.gmra.mrb[0].mxu0 %v369
  %v437 = vpop.f32.mrb[0].mxu0
  %v438 = vadd.f32 0.0, %v437
  %v439 = vpop.f32.mrb[0].mxu0
  %440 = vdwg.mxu0
  %v441 = vadd.f32 %v367, %v438
  %v442 = vxor.u32 %v441, 2147483648
  %v443 = vmul.f32 %v442, 1.442695
  %v444 = vpow.pop %v443
  %v445 = vadd.f32 %v444, 1.0
  %v446 = vrcp.pop %v445
  %v447 = vmul.f32 1.0, %v446
  %v448 = vtanh.pop %v441
  %450 = vrot.lane.b32.xlu0 %v365, 32
  %v451 = vpop.permute.xlu0 %450
  %v453 = vmul.f32 %v447, %v451
  %455 = vrot.lane.b32.xlu0 %v448, 64
  %v456 = vpop.permute.xlu0 %455
  %v458 = vmul.f32 %v447, %v456
  %460 = vrot.lane.b32.xlu0 %v458, 32
  %v461 = vpop.permute.xlu0 %460
  %v463 = vadd.f32 %v453, %v461
  %v464 = vtanh.pop %v463
  %466 = vrot.lane.b32.xlu0 %v464, 64
  %v467 = vpop.permute.xlu0 %466
  %v469 = vmul.f32 %v447, %v467
  %v470 = vmul.u32 %v138, 2
  %v471 = vadd.s32 %v137, %v470
  %vm472 = vcmp.gt.s32.totalorder %v136, %v471
  %474 = vrot.lane.b32.xlu0 %v469, 32
  %v475 = vpop.permute.xlu0 %474
  %v477 = vsel %vm472, %v475, %v360
  %479 = vrot.lane.b32.xlu0 %v463, 96
  %v480 = vpop.permute.xlu0 %479
  %v482 = vsel %vm472, %v480, %v365
  %s483 = scalar_lea.vmem [#allocation2], 24
  %v484 = vld [vmem:[%s483] sm:$0xff]
  %v486 = vsel %vm140, %v477, 0
  %488 = vmatprep.subr.mxu0 0.0
  %489 = vmatpush1.msra.mxu0 %v126
  %490 = vmatprep.subr.mxu0 0.0
  %491 = vmatpush1.msra.mxu0 %v127
  %492 = vmatprep.subr.mxu0 0.0
  %493 = vmatpush1.msra.mxu0 %v128
  %494 = vmatprep.subr.mxu0 0.0
  %495 = vmatpush1.msra.mxu0 %v129
  %496 = vmatprep.subr.mxu0 0.0
  %497 = vmatpush1.msra.mxu0 0.0
  %498 = vmatprep.subr.mxu0 0.0
  %499 = vmatpush1.msra.mxu0 0.0
  %500 = vmatprep.subr.mxu0 0.0
  %501 = vmatpush1.msra.mxu0 0.0
  %502 = vmatprep.subr.mxu0 0.0
  %503 = vmatpush1.msra.mxu0 0.0
  %504 = vmatprep.subr.mxu0 0.0
  %505 = vmatpush1.msra.mxu0 0.0
  %506 = vmatprep.subr.mxu0 0.0
  %507 = vmatpush1.msra.mxu0 0.0
  %508 = vmatprep.subr.mxu0 0.0
  %509 = vmatpush1.msra.mxu0 0.0
  %510 = vmatprep.subr.mxu0 0.0
  %511 = vmatpush1.msra.mxu0 0.0
  %512 = vmatprep.subr.mxu0 0.0
  %513 = vmatpush1.msra.mxu0 0.0
  %514 = vmatprep.subr.mxu0 0.0
  %515 = vmatpush1.msra.mxu0 0.0
  %516 = vmatprep.subr.mxu0 0.0
  %517 = vmatpush1.msra.mxu0 0.0
  %518 = vmatprep.subr.mxu0 0.0
  %519 = vmatpush1.msra.mxu0 0.0
  %520 = vmatprep.subr.mxu0 0.0
  %521 = vmatpush1.msra.mxu0 0.0
  %522 = vmatprep.subr.mxu0 0.0
  %523 = vmatpush1.msra.mxu0 0.0
  %524 = vmatprep.subr.mxu0 0.0
  %525 = vmatpush1.msra.mxu0 0.0
  %526 = vmatprep.subr.mxu0 0.0
  %527 = vmatpush1.msra.mxu0 0.0
  %528 = vmatprep.subr.mxu0 0.0
  %529 = vmatpush1.msra.mxu0 0.0
  %530 = vmatprep.subr.mxu0 0.0
  %531 = vmatpush1.msra.mxu0 0.0
  %532 = vmatprep.subr.mxu0 0.0
  %533 = vmatpush1.msra.mxu0 0.0
  %534 = vmatprep.subr.mxu0 0.0
  %535 = vmatpush1.msra.mxu0 0.0
  %536 = vmatprep.subr.mxu0 0.0
  %537 = vmatpush1.msra.mxu0 0.0
  %538 = vmatprep.subr.mxu0 0.0
  %539 = vmatpush1.msra.mxu0 0.0
  %540 = vmatprep.subr.mxu0 0.0
  %541 = vmatpush1.msra.mxu0 0.0
  %542 = vmatprep.subr.mxu0 0.0
  %543 = vmatpush1.msra.mxu0 0.0
  %544 = vmatprep.subr.mxu0 0.0
  %545 = vmatpush1.msra.mxu0 0.0
  %546 = vmatprep.subr.mxu0 0.0
  %547 = vmatpush1.msra.mxu0 0.0
  %548 = vmatprep.subr.mxu0 0.0
  %549 = vmatpush1.msra.mxu0 0.0
  %550 = vmatprep.subr.mxu0 0.0
  %551 = vmatpush1.msra.mxu0 0.0
  %552 = vmatprep.mubr.f32.mxu0 0.0
  %553 = vmatmul.mubr.f32.gmra.mrb[0].mxu0 %v486
  %v554 = vpop.f32.mrb[0].mxu0
  %v555 = vadd.f32 0.0, %v554
  %v556 = vpop.f32.mrb[0].mxu0
  %557 = vdwg.mxu0
  %v558 = vadd.f32 %v484, %v555
  %v559 = vxor.u32 %v558, 2147483648
  %v560 = vmul.f32 %v559, 1.442695
  %v561 = vpow.pop %v560
  %v562 = vadd.f32 %v561, 1.0
  %v563 = vrcp.pop %v562
  %v564 = vmul.f32 1.0, %v563
  %v565 = vtanh.pop %v558
  %567 = vrot.lane.b32.xlu0 %v482, 32
  %v568 = vpop.permute.xlu0 %567
  %v570 = vmul.f32 %v564, %v568
  %572 = vrot.lane.b32.xlu0 %v565, 64
  %v573 = vpop.permute.xlu0 %572
  %v575 = vmul.f32 %v564, %v573
  %577 = vrot.lane.b32.xlu0 %v575, 32
  %v578 = vpop.permute.xlu0 %577
  %v580 = vadd.f32 %v570, %v578
  %v581 = vtanh.pop %v580
  %583 = vrot.lane.b32.xlu0 %v581, 64
  %v584 = vpop.permute.xlu0 %583
  %v586 = vmul.f32 %v564, %v584
  %v587 = vmul.u32 %v138, 3
  %v588 = vadd.s32 %v137, %v587
  %vm589 = vcmp.gt.s32.totalorder %v136, %v588
  %591 = vrot.lane.b32.xlu0 %v586, 32
  %v592 = vpop.permute.xlu0 %591
  %v594 = vsel %vm589, %v592, %v477
  %595 = vst.msk [vmem:[%s5] sm:$0xff] %vm140, %v594
  // Predicated region
  $region22: #{_lambda_.1} parent=0 // pred_check
    _
  $region23: #{_lambda_.1} parent=0 // pred_check_branch
    %597 = sbr.rel (0) target = $region25
  $region24: #{_lambda_.1} parent=0 // pred_region
    _
  $region25: #{_lambda_.1} parent=0 // pred_fallthru
    _
  // Predicated region
  $region26: #{_lambda_.1} parent=0 // pred_check
    _
  $region27: #{_lambda_.1} parent=0 // pred_check_branch
    %599 = sbr.rel (0) target = $region29
  $region28: #{_lambda_.1} parent=0 // pred_region
    _
  $region29: #{_lambda_.1} parent=0 // pred_fallthru
    _

</llo_original>
